<compile_context>
chip_gen: v6e
topology: v6e:2x2x1
jax: 0.10.0
libtpu: 0.0.40
codegen_flags: <defaults>
</compile_context>

<pallas_src>
import functools

import jax
import jax.numpy as jnp
import numpy as np
from jax.experimental import pallas as pl
from jax.experimental.pallas import tpu as pltpu


# ----------------------------------------------------------------------------
# small helpers
# ----------------------------------------------------------------------------
def _round_up(x, m):
    return (x + m - 1) // m * m


def _largest_divisor_le(n, cap, step):
    """Largest t <= cap with t % step == 0 and n % t == 0 (assumes step divides n)."""
    best = None
    t = step
    while t <= min(cap, n):
        if n % t == 0:
            best = t
        t += step
    return best if best is not None else n


# ----------------------------------------------------------------------------
# Pallas kernels
# ----------------------------------------------------------------------------
def _matmul_bias_kernel(x_ref, w_ref, b_ref, o_ref):
    """o = x @ w + b on one (TM, K) x (K, TN) tile.  Used for the hoisted input
    projection and for the final Linear layer (both fully parallel GEMMs)."""
    o_ref[...] = (
        jnp.dot(x_ref[...], w_ref[...], preferred_element_type=jnp.float32)
        + b_ref[...]
    ).astype(o_ref.dtype)


def _rnn_scan_kernel(px_ref, h0_ref, whh_ref, out_ref, hlast_ref, h_scr, *, steps):
    """One grid step = one block of `steps` time steps.

    px_ref   : (TB, B, H)  precomputed x@W_ih^T + (b_ih+b_hh) for this time block
    h0_ref   : (B, H)      initial hidden for this layer
    whh_ref  : (H, H)      W_hh^T (pre-transposed, padded)
    out_ref  : (TB, B, H)  hidden states for this time block
    hlast_ref: (B, H)      final hidden state (constant block index -> resident output)
    h_scr    : (B, H)      carried hidden (VMEM scratch, persists across grid steps)
    """
    @pl.when(pl.program_id(0) == 0)
    def _():
        h_scr[...] = h0_ref[...]

    h = h_scr[...]                     # (B, H) f32
    w = whh_ref[...]                   # (H, H) f32 -- hoisted out of the unrolled loop
    for i in range(steps):             # unrolled: only h @ W_hh^T sits on the serial path
        h = jnp.tanh(px_ref[i] + jnp.dot(h, w, preferred_element_type=jnp.float32))
        out_ref[i] = h.astype(out_ref.dtype)

    h_scr[...] = h

    @pl.when(pl.program_id(0) == pl.num_programs(0) - 1)
    def _():
        hlast_ref[...] = h.astype(hlast_ref.dtype)


# ----------------------------------------------------------------------------
# pallas_call wrappers
# ----------------------------------------------------------------------------
def matmul_bias_pallas(x, w, b, *, tm_cap=256, tn_cap=512):
    """x: (M, K), w: (K, N), b: (1, N) -> (M, N), tiled parallel GEMM."""
    M, K = x.shape
    N = w.shape[1]
    TM = _largest_divisor_le(M, tm_cap, 8)
    TN = _largest_divisor_le(N, tn_cap, 128)
    return pl.pallas_call(
        _matmul_bias_kernel,
        out_shape=jax.ShapeDtypeStruct((M, N), jnp.float32),
        grid=(M // TM, N // TN),
        in_specs=[
            pl.BlockSpec((TM, K), lambda i, j: (i, 0)),
            pl.BlockSpec((K, TN), lambda i, j: (0, j)),
            pl.BlockSpec((1, TN), lambda i, j: (0, j)),
        ],
        out_specs=pl.BlockSpec((TM, TN), lambda i, j: (i, j)),
        compiler_params=pltpu.CompilerParams(
            dimension_semantics=("parallel", "parallel")),
    )(x, w, b)


def rnn_scan_pallas(px_tbh, h0, whh_t, *, tb_cap=32):
    """Run the tanh recurrence over the whole (pre-projected) sequence.

    px_tbh: (T, B_pad, H_pad) time-major projected inputs
    h0    : (B_pad, H_pad)
    whh_t : (H_pad, H_pad)
    returns (out (T, B_pad, H_pad), h_last (B_pad, H_pad))
    """
    T, Bp, Hp = px_tbh.shape
    TB = _largest_divisor_le(T, tb_cap, 1)
    kernel = functools.partial(_rnn_scan_kernel, steps=TB)
    return pl.pallas_call(
        kernel,
        out_shape=(jax.ShapeDtypeStruct((T, Bp, Hp), jnp.float32),
                   jax.ShapeDtypeStruct((Bp, Hp), jnp.float32)),
        grid=(T // TB,),
        in_specs=[
            pl.BlockSpec((TB, Bp, Hp), lambda t: (t, 0, 0)),   # px time block (pipelined)
            pl.BlockSpec((Bp, Hp), lambda t: (0, 0)),          # h0 (resident)
            pl.BlockSpec((Hp, Hp), lambda t: (0, 0)),          # W_hh^T (resident)
        ],
        out_specs=(
            pl.BlockSpec((TB, Bp, Hp), lambda t: (t, 0, 0)),   # hidden states
            pl.BlockSpec((Bp, Hp), lambda t: (0, 0)),          # final hidden (resident)
        ),
        scratch_shapes=[pltpu.VMEM((Bp, Hp), jnp.float32)],
        compiler_params=pltpu.CompilerParams(
            dimension_semantics=("arbitrary",)),               # sequential recurrence
    )(px_tbh, h0, whh_t)


# ----------------------------------------------------------------------------
# parameter prep (pre-transpose, pre-fuse bias, pad once)
# ----------------------------------------------------------------------------
def prepare_params(params):
    V, H = params["embed"].shape
    L = params["w_ih"].shape[0]
    Hp = _round_up(H, 128)
    Vp = _round_up(V, 128)

    embed_p = jnp.zeros((V, Hp), jnp.float32).at[:, :H].set(params["embed"])
    w_ih_t = jnp.zeros((L, Hp, Hp), jnp.float32).at[:, :H, :H].set(
        jnp.swapaxes(params["w_ih"], 1, 2))
    w_hh_t = jnp.zeros((L, Hp, Hp), jnp.float32).at[:, :H, :H].set(
        jnp.swapaxes(params["w_hh"], 1, 2))
    b_rnn = jnp.zeros((L, 1, Hp), jnp.float32).at[:, 0, :H].set(
        params["b_ih"] + params["b_hh"])
    w_fc_t = jnp.zeros((Hp, Vp), jnp.float32).at[:H, :V].set(params["w_fc"].T)
    b_fc = jnp.zeros((1, Vp), jnp.float32).at[0, :V].set(params["b_fc"])
    return {
        "embed": embed_p, "w_ih_t": w_ih_t, "w_hh_t": w_hh_t,
        "b_rnn": b_rnn, "w_fc_t": w_fc_t, "b_fc": b_fc,
    }


# ----------------------------------------------------------------------------
# forward pass (matches CharRNN.forward)
# ----------------------------------------------------------------------------
def char_rnn_forward(prepared, x_tokens, hidden):
    """x_tokens: (B, T) int32, hidden: (n_layers, B, H).
    returns (logits (B*T, V), new_hidden (n_layers, B, H))."""
    B, T = x_tokens.shape
    n_layers, _, H = hidden.shape
    V = prepared["embed"].shape[0]
    Hp = prepared["embed"].shape[1]
    Vp = prepared["w_fc_t"].shape[1]
    Bp = _round_up(B, 8)

    # Time-major, batch-padded token matrix (transpose only the tiny int32 indices).
    tok = jnp.zeros((T, Bp), jnp.int32).at[:, :B].set(x_tokens.T.astype(jnp.int32))
    # TODO(synk): embedding gather stays in XLA (data-dependent row lookup); a Pallas
    # DMA-gather kernel is possible but not worthwhile at these sizes.
    layer_in = jnp.take(prepared["embed"], tok, axis=0)        # (T, Bp, Hp)

    h0_pad = jnp.zeros((n_layers, Bp, Hp), jnp.float32).at[:, :B, :H].set(hidden)

    h_lasts = []
    for l in range(n_layers):
        # Hoisted input projection: one big parallel GEMM over all T*Bp rows.
        px = matmul_bias_pallas(layer_in.reshape(T * Bp, Hp),
                                prepared["w_ih_t"][l],
                                prepared["b_rnn"][l]).reshape(T, Bp, Hp)
        out_tbh, h_last = rnn_scan_pallas(px, h0_pad[l], prepared["w_hh_t"][l])
        h_lasts.append(h_last)
        layer_in = out_tbh

    new_hidden = jnp.stack(h_lasts, axis=0)[:, :B, :H]         # (n_layers, B, H)

    # Final Linear layer on all T*Bp rows (parallel tiled GEMM, lane-dense output).
    logits_pad = matmul_bias_pallas(layer_in.reshape(T * Bp, Hp),
                                    prepared["w_fc_t"],
                                    prepared["b_fc"]).reshape(T, Bp, Vp)
    # PyTorch flattens batch-first: row order b*T + t.  One small reorder on the
    # unpadded logits is left to XLA.
    logits = jnp.transpose(logits_pad[:, :B, :V], (1, 0, 2)).reshape(B * T, V)
    return logits, new_hidden


# ----------------------------------------------------------------------------
# deterministic parameter init (PyTorch defaults: Embedding ~ N(0,1),
# RNN / Linear ~ U(-1/sqrt(H), 1/sqrt(H)))
# ----------------------------------------------------------------------------
def init_params(key, vocab_size, hidden_size, n_layers):
    ks = jax.random.split(key, 7)
    bound = 1.0 / np.sqrt(hidden_size)
    u = lambda k, shape: jax.random.uniform(k, shape, jnp.float32, -bound, bound)
    return {
        "embed": jax.random.normal(ks[0], (vocab_size, hidden_size), jnp.float32),
        "w_ih": u(ks[1], (n_layers, hidden_size, hidden_size)),
        "w_hh": u(ks[2], (n_layers, hidden_size, hidden_size)),
        "b_ih": u(ks[3], (n_layers, hidden_size)),
        "b_hh": u(ks[4], (n_layers, hidden_size)),
        "w_fc": u(ks[5], (vocab_size, hidden_size)),
        "b_fc": u(ks[6], (vocab_size,)),
    }


# ----------------------------------------------------------------------------
# pure-JAX reference (mirrors PyTorch semantics) for a correctness check
# ----------------------------------------------------------------------------
def char_rnn_reference(params, x_tokens, hidden):
    B, T = x_tokens.shape
    n_layers = hidden.shape[0]
    emb = jnp.take(params["embed"], x_tokens, axis=0)      # (B, T, H)
    layer_in = emb
    new_hidden = []
    for l in range(n_layers):
        h = hidden[l]
        outs = []
        for t in range(T):
            h = jnp.tanh(layer_in[:, t] @ params["w_ih"][l].T + params["b_ih"][l]
                         + h @ params["w_hh"][l].T + params["b_hh"][l])
            outs.append(h)
        layer_in = jnp.stack(outs, axis=1)                  # (B, T, H)
        new_hidden.append(h)
    H = params["embed"].shape[1]
    out = layer_in.reshape(B * T, H) @ params["w_fc"].T + params["b_fc"]
    return out, jnp.stack(new_hidden, axis=0)


if __name__ == "__main__":
    vocab_size = 64
    hidden_size = 32
    n_layers = 1
    B, T = 2, 8

    key = jax.random.PRNGKey(0)
    k_params, k_tok = jax.random.split(key)
    params = init_params(k_params, vocab_size, hidden_size, n_layers)
    prepared = prepare_params(params)

    x_tokens = jax.random.randint(k_tok, (B, T), 0, vocab_size, dtype=jnp.int32)
    hidden0 = jnp.zeros((n_layers, B, hidden_size), jnp.float32)  # init_hidden

    fwd = jax.jit(char_rnn_forward)
    logits, new_hidden = jax.block_until_ready(fwd(prepared, x_tokens, hidden0))

    ref_logits, ref_hidden = char_rnn_reference(params, x_tokens, hidden0)
    np.testing.assert_allclose(np.asarray(logits), np.asarray(ref_logits),
                               rtol=1e-4, atol=1e-4)
    np.testing.assert_allclose(np.asarray(new_hidden), np.asarray(ref_hidden),
                               rtol=1e-4, atol=1e-4)

    assert logits.shape == (B * T, vocab_size)
    assert new_hidden.shape == (n_layers, B, hidden_size)
    print("KERNEL_OK")
</pallas_src>

<mosaic_0001>
module attributes {stable_mosaic.version = 11 : i64} {
  func.func @_matmul_bias_kernel(%arg0: i32, %arg1: i32, %arg2: memref<64x128xf32, #tpu.memory_space<vmem>>, %arg3: memref<128x128xf32, #tpu.memory_space<vmem>>, %arg4: memref<1x128xf32, #tpu.memory_space<vmem>>, %arg5: memref<64x128xf32, #tpu.memory_space<vmem>>) attributes {dimension_semantics = [#tpu.dimension_semantics<parallel>, #tpu.dimension_semantics<parallel>], iteration_bounds = array<i64: 1, 1>, scalar_prefetch = 0 : i64, scratch_operands = 0 : i64, tpu.core_type = #tpu.core_type<tc>, window_params = [{transform_indices = @transform_0, window_bounds = array<i64: 64, 128>}, {transform_indices = @transform_1, window_bounds = array<i64: 128, 128>}, {transform_indices = @transform_2, window_bounds = array<i64: 1, 128>}, {transform_indices = @transform_3, window_bounds = array<i64: 64, 128>}]} {
    %c0 = arith.constant 0 : index
    %c0_0 = arith.constant 0 : index
    %0 = vector.load %arg2[%c0, %c0_0] : memref<64x128xf32, #tpu.memory_space<vmem>>, vector<64x128xf32>
    %c0_1 = arith.constant 0 : index
    %c0_2 = arith.constant 0 : index
    %1 = vector.load %arg3[%c0_1, %c0_2] : memref<128x128xf32, #tpu.memory_space<vmem>>, vector<128x128xf32>
    %cst = arith.constant dense<0.000000e+00> : vector<64x128xf32>
    %2 = tpu.matmul %0, %1, %cst {dimension_numbers = #tpu.dot_dimension_numbers<[1], [0], [0], [1], [0, 0, 1, 1], [], []>} : vector<64x128xf32>, vector<128x128xf32>, vector<64x128xf32> -> vector<64x128xf32>
    %c0_3 = arith.constant 0 : index
    %c0_4 = arith.constant 0 : index
    %3 = vector.load %arg4[%c0_3, %c0_4] : memref<1x128xf32, #tpu.memory_space<vmem>>, vector<1x128xf32>
    %4 = vector.broadcast %3 : vector<1x128xf32> to vector<64x128xf32>
    %5 = arith.addf %2, %4 : vector<64x128xf32>
    %c0_5 = arith.constant 0 : index
    %c0_6 = arith.constant 0 : index
    %6 = vector.load %arg5[%c0_5, %c0_6] : memref<64x128xf32, #tpu.memory_space<vmem>>, vector<64x128xf32>
    tpu.vector_store %arg5[%c0_5, %c0_6], %5 {strides = array<i32>} : memref<64x128xf32, #tpu.memory_space<vmem>>, vector<64x128xf32>,
    return
  }
  func.func @transform_0(%arg0: i32, %arg1: i32) -> (i32, i32) {
    %c0_i32 = arith.constant 0 : i32
    %c0_i32_0 = arith.constant 0 : i32
    return %arg0, %c0_i32 : i32, i32
  }
  func.func @transform_1(%arg0: i32, %arg1: i32) -> (i32, i32) {
    %c0_i32 = arith.constant 0 : i32
    %c0_i32_0 = arith.constant 0 : i32
    return %c0_i32, %arg1 : i32, i32
  }
  func.func @transform_2(%arg0: i32, %arg1: i32) -> (i32, i32) {
    %c0_i32 = arith.constant 0 : i32
    %c0_i32_0 = arith.constant 0 : i32
    return %c0_i32, %arg1 : i32, i32
  }
  func.func @transform_3(%arg0: i32, %arg1: i32) -> (i32, i32) {
    %c0_i32 = arith.constant 0 : i32
    return %arg0, %arg1 : i32, i32
  }
}

module attributes {stable_mosaic.version = 11 : i64} {
  func.func @_rnn_scan_kernel(%arg0: i32, %arg1: memref<8x8x128xf32, #tpu.memory_space<vmem>>, %arg2: memref<8x128xf32, #tpu.memory_space<vmem>>, %arg3: memref<128x128xf32, #tpu.memory_space<vmem>>, %arg4: memref<8x8x128xf32, #tpu.memory_space<vmem>>, %arg5: memref<8x128xf32, #tpu.memory_space<vmem>>, %arg6: memref<8x128xf32, #tpu.memory_space<vmem>>) attributes {dimension_semantics = [#tpu.dimension_semantics<arbitrary>], iteration_bounds = array<i64: 1>, scalar_prefetch = 0 : i64, scratch_operands = 1 : i64, tpu.core_type = #tpu.core_type<tc>, window_params = [{transform_indices = @transform_0, window_bounds = array<i64: 8, 8, 128>}, {pipeline_mode = #tpu.pipeline_mode<synchronous>, transform_indices = @transform_1, window_bounds = array<i64: 8, 128>}, {pipeline_mode = #tpu.pipeline_mode<synchronous>, transform_indices = @transform_2, window_bounds = array<i64: 128, 128>}, {transform_indices = @transform_3, window_bounds = array<i64: 8, 8, 128>}, {pipeline_mode = #tpu.pipeline_mode<synchronous>, transform_indices = @transform_4, window_bounds = array<i64: 8, 128>}]} {
    %c0_i32 = arith.constant 0 : i32
    %0 = arith.cmpi eq, %arg0, %c0_i32 : i32
    %1 = arith.extui %0 : i1 to i32
    %c0_i32_0 = arith.constant 0 : i32
    %2 = arith.cmpi ne, %1, %c0_i32_0 : i32
    scf.if %2 {
      %c0_56 = arith.constant 0 : index
      %c0_57 = arith.constant 0 : index
      %73 = vector.load %arg2[%c0_56, %c0_57] : memref<8x128xf32, #tpu.memory_space<vmem>>, vector<8x128xf32>
      %c0_58 = arith.constant 0 : index
      %c0_59 = arith.constant 0 : index
      %74 = vector.load %arg6[%c0_58, %c0_59] : memref<8x128xf32, #tpu.memory_space<vmem>>, vector<8x128xf32>
      tpu.vector_store %arg6[%c0_58, %c0_59], %73 {strides = array<i32>} : memref<8x128xf32, #tpu.memory_space<vmem>>, vector<8x128xf32>,
    } else {
    }
    %c0 = arith.constant 0 : index
    %c0_1 = arith.constant 0 : index
    %3 = vector.load %arg6[%c0, %c0_1] : memref<8x128xf32, #tpu.memory_space<vmem>>, vector<8x128xf32>
    %c0_2 = arith.constant 0 : index
    %c0_3 = arith.constant 0 : index
    %4 = vector.load %arg3[%c0_2, %c0_3] : memref<128x128xf32, #tpu.memory_space<vmem>>, vector<128x128xf32>
    %c0_4 = arith.constant 0 : index
    %c0_5 = arith.constant 0 : index
    %c0_6 = arith.constant 0 : index
    %5 = vector.load %arg1[%c0_4, %c0_5, %c0_6] : memref<8x8x128xf32, #tpu.memory_space<vmem>>, vector<1x8x128xf32>
    %6 = vector.shape_cast %5 : vector<1x8x128xf32> to vector<8x128xf32>
    %cst = arith.constant dense<0.000000e+00> : vector<8x128xf32>
    %7 = tpu.matmul %3, %4, %cst {dimension_numbers = #tpu.dot_dimension_numbers<[1], [0], [0], [1], [0, 0, 1, 1], [], []>} : vector<8x128xf32>, vector<128x128xf32>, vector<8x128xf32> -> vector<8x128xf32>
    %8 = arith.addf %6, %7 : vector<8x128xf32>
    %9 = math.tanh %8 : vector<8x128xf32>
    %c0_7 = arith.constant 0 : index
    %c0_8 = arith.constant 0 : index
    %c0_9 = arith.constant 0 : index
    %10 = vector.load %arg4[%c0_7, %c0_8, %c0_9] : memref<8x8x128xf32, #tpu.memory_space<vmem>>, vector<1x8x128xf32>
    %11 = vector.shape_cast %10 : vector<1x8x128xf32> to vector<8x128xf32>
    %12 = vector.shape_cast %9 : vector<8x128xf32> to vector<1x8x128xf32>
    tpu.vector_store %arg4[%c0_7, %c0_8, %c0_9], %12 {strides = array<i32>} : memref<8x8x128xf32, #tpu.memory_space<vmem>>, vector<1x8x128xf32>,
    %c1 = arith.constant 1 : index
    %c0_10 = arith.constant 0 : index
    %c0_11 = arith.constant 0 : index
    %13 = vector.load %arg1[%c1, %c0_10, %c0_11] : memref<8x8x128xf32, #tpu.memory_space<vmem>>, vector<1x8x128xf32>
    %14 = vector.shape_cast %13 : vector<1x8x128xf32> to vector<8x128xf32>
    %cst_12 = arith.constant dense<0.000000e+00> : vector<8x128xf32>
    %15 = tpu.matmul %9, %4, %cst_12 {dimension_numbers = #tpu.dot_dimension_numbers<[1], [0], [0], [1], [0, 0, 1, 1], [], []>} : vector<8x128xf32>, vector<128x128xf32>, vector<8x128xf32> -> vector<8x128xf32>
    %16 = arith.addf %14, %15 : vector<8x128xf32>
    %17 = math.tanh %16 : vector<8x128xf32>
    %c1_13 = arith.constant 1 : index
    %c0_14 = arith.constant 0 : index
    %c0_15 = arith.constant 0 : index
    %18 = vector.load %arg4[%c1_13, %c0_14, %c0_15] : memref<8x8x128xf32, #tpu.memory_space<vmem>>, vector<1x8x128xf32>
    %19 = vector.shape_cast %18 : vector<1x8x128xf32> to vector<8x128xf32>
    %20 = vector.shape_cast %17 : vector<8x128xf32> to vector<1x8x128xf32>
    tpu.vector_store %arg4[%c1_13, %c0_14, %c0_15], %20 {strides = array<i32>} : memref<8x8x128xf32, #tpu.memory_space<vmem>>, vector<1x8x128xf32>,
    %c2 = arith.constant 2 : index
    %c0_16 = arith.constant 0 : index
    %c0_17 = arith.constant 0 : index
    %21 = vector.load %arg1[%c2, %c0_16, %c0_17] : memref<8x8x128xf32, #tpu.memory_space<vmem>>, vector<1x8x128xf32>
    %22 = vector.shape_cast %21 : vector<1x8x128xf32> to vector<8x128xf32>
    %cst_18 = arith.constant dense<0.000000e+00> : vector<8x128xf32>
    %23 = tpu.matmul %17, %4, %cst_18 {dimension_numbers = #tpu.dot_dimension_numbers<[1], [0], [0], [1], [0, 0, 1, 1], [], []>} : vector<8x128xf32>, vector<128x128xf32>, vector<8x128xf32> -> vector<8x128xf32>
    %24 = arith.addf %22, %23 : vector<8x128xf32>
    %25 = math.tanh %24 : vector<8x128xf32>
    %c2_19 = arith.constant 2 : index
    %c0_20 = arith.constant 0 : index
    %c0_21 = arith.constant 0 : index
    %26 = vector.load %arg4[%c2_19, %c0_20, %c0_21] : memref<8x8x128xf32, #tpu.memory_space<vmem>>, vector<1x8x128xf32>
    %27 = vector.shape_cast %26 : vector<1x8x128xf32> to vector<8x128xf32>
    %28 = vector.shape_cast %25 : vector<8x128xf32> to vector<1x8x128xf32>
    tpu.vector_store %arg4[%c2_19, %c0_20, %c0_21], %28 {strides = array<i32>} : memref<8x8x128xf32, #tpu.memory_space<vmem>>, vector<1x8x128xf32>,
    %c3 = arith.constant 3 : index
    %c0_22 = arith.constant 0 : index
    %c0_23 = arith.constant 0 : index
    %29 = vector.load %arg1[%c3, %c0_22, %c0_23] : memref<8x8x128xf32, #tpu.memory_space<vmem>>, vector<1x8x128xf32>
    %30 = vector.shape_cast %29 : vector<1x8x128xf32> to vector<8x128xf32>
    %cst_24 = arith.constant dense<0.000000e+00> : vector<8x128xf32>
    %31 = tpu.matmul %25, %4, %cst_24 {dimension_numbers = #tpu.dot_dimension_numbers<[1], [0], [0], [1], [0, 0, 1, 1], [], []>} : vector<8x128xf32>, vector<128x128xf32>, vector<8x128xf32> -> vector<8x128xf32>
    %32 = arith.addf %30, %31 : vector<8x128xf32>
    %33 = math.tanh %32 : vector<8x128xf32>
    %c3_25 = arith.constant 3 : index
    %c0_26 = arith.constant 0 : index
    %c0_27 = arith.constant 0 : index
    %34 = vector.load %arg4[%c3_25, %c0_26, %c0_27] : memref<8x8x128xf32, #tpu.memory_space<vmem>>, vector<1x8x128xf32>
    %35 = vector.shape_cast %34 : vector<1x8x128xf32> to vector<8x128xf32>
    %36 = vector.shape_cast %33 : vector<8x128xf32> to vector<1x8x128xf32>
    tpu.vector_store %arg4[%c3_25, %c0_26, %c0_27], %36 {strides = array<i32>} : memref<8x8x128xf32, #tpu.memory_space<vmem>>, vector<1x8x128xf32>,
    %c4 = arith.constant 4 : index
    %c0_28 = arith.constant 0 : index
    %c0_29 = arith.constant 0 : index
    %37 = vector.load %arg1[%c4, %c0_28, %c0_29] : memref<8x8x128xf32, #tpu.memory_space<vmem>>, vector<1x8x128xf32>
    %38 = vector.shape_cast %37 : vector<1x8x128xf32> to vector<8x128xf32>
    %cst_30 = arith.constant dense<0.000000e+00> : vector<8x128xf32>
    %39 = tpu.matmul %33, %4, %cst_30 {dimension_numbers = #tpu.dot_dimension_numbers<[1], [0], [0], [1], [0, 0, 1, 1], [], []>} : vector<8x128xf32>, vector<128x128xf32>, vector<8x128xf32> -> vector<8x128xf32>
    %40 = arith.addf %38, %39 : vector<8x128xf32>
    %41 = math.tanh %40 : vector<8x128xf32>
    %c4_31 = arith.constant 4 : index
    %c0_32 = arith.constant 0 : index
    %c0_33 = arith.constant 0 : index
    %42 = vector.load %arg4[%c4_31, %c0_32, %c0_33] : memref<8x8x128xf32, #tpu.memory_space<vmem>>, vector<1x8x128xf32>
    %43 = vector.shape_cast %42 : vector<1x8x128xf32> to vector<8x128xf32>
    %44 = vector.shape_cast %41 : vector<8x128xf32> to vector<1x8x128xf32>
    tpu.vector_store %arg4[%c4_31, %c0_32, %c0_33], %44 {strides = array<i32>} : memref<8x8x128xf32, #tpu.memory_space<vmem>>, vector<1x8x128xf32>,
    %c5 = arith.constant 5 : index
    %c0_34 = arith.constant 0 : index
    %c0_35 = arith.constant 0 : index
    %45 = vector.load %arg1[%c5, %c0_34, %c0_35] : memref<8x8x128xf32, #tpu.memory_space<vmem>>, vector<1x8x128xf32>
    %46 = vector.shape_cast %45 : vector<1x8x128xf32> to vector<8x128xf32>
    %cst_36 = arith.constant dense<0.000000e+00> : vector<8x128xf32>
    %47 = tpu.matmul %41, %4, %cst_36 {dimension_numbers = #tpu.dot_dimension_numbers<[1], [0], [0], [1], [0, 0, 1, 1], [], []>} : vector<8x128xf32>, vector<128x128xf32>, vector<8x128xf32> -> vector<8x128xf32>
    %48 = arith.addf %46, %47 : vector<8x128xf32>
    %49 = math.tanh %48 : vector<8x128xf32>
    %c5_37 = arith.constant 5 : index
    %c0_38 = arith.constant 0 : index
    %c0_39 = arith.constant 0 : index
    %50 = vector.load %arg4[%c5_37, %c0_38, %c0_39] : memref<8x8x128xf32, #tpu.memory_space<vmem>>, vector<1x8x128xf32>
    %51 = vector.shape_cast %50 : vector<1x8x128xf32> to vector<8x128xf32>
    %52 = vector.shape_cast %49 : vector<8x128xf32> to vector<1x8x128xf32>
    tpu.vector_store %arg4[%c5_37, %c0_38, %c0_39], %52 {strides = array<i32>} : memref<8x8x128xf32, #tpu.memory_space<vmem>>, vector<1x8x128xf32>,
    %c6 = arith.constant 6 : index
    %c0_40 = arith.constant 0 : index
    %c0_41 = arith.constant 0 : index
    %53 = vector.load %arg1[%c6, %c0_40, %c0_41] : memref<8x8x128xf32, #tpu.memory_space<vmem>>, vector<1x8x128xf32>
    %54 = vector.shape_cast %53 : vector<1x8x128xf32> to vector<8x128xf32>
    %cst_42 = arith.constant dense<0.000000e+00> : vector<8x128xf32>
    %55 = tpu.matmul %49, %4, %cst_42 {dimension_numbers = #tpu.dot_dimension_numbers<[1], [0], [0], [1], [0, 0, 1, 1], [], []>} : vector<8x128xf32>, vector<128x128xf32>, vector<8x128xf32> -> vector<8x128xf32>
    %56 = arith.addf %54, %55 : vector<8x128xf32>
    %57 = math.tanh %56 : vector<8x128xf32>
    %c6_43 = arith.constant 6 : index
    %c0_44 = arith.constant 0 : index
    %c0_45 = arith.constant 0 : index
    %58 = vector.load %arg4[%c6_43, %c0_44, %c0_45] : memref<8x8x128xf32, #tpu.memory_space<vmem>>, vector<1x8x128xf32>
    %59 = vector.shape_cast %58 : vector<1x8x128xf32> to vector<8x128xf32>
    %60 = vector.shape_cast %57 : vector<8x128xf32> to vector<1x8x128xf32>
    tpu.vector_store %arg4[%c6_43, %c0_44, %c0_45], %60 {strides = array<i32>} : memref<8x8x128xf32, #tpu.memory_space<vmem>>, vector<1x8x128xf32>,
    %c7 = arith.constant 7 : index
    %c0_46 = arith.constant 0 : index
    %c0_47 = arith.constant 0 : index
    %61 = vector.load %arg1[%c7, %c0_46, %c0_47] : memref<8x8x128xf32, #tpu.memory_space<vmem>>, vector<1x8x128xf32>
    %62 = vector.shape_cast %61 : vector<1x8x128xf32> to vector<8x128xf32>
    %cst_48 = arith.constant dense<0.000000e+00> : vector<8x128xf32>
    %63 = tpu.matmul %57, %4, %cst_48 {dimension_numbers = #tpu.dot_dimension_numbers<[1], [0], [0], [1], [0, 0, 1, 1], [], []>} : vector<8x128xf32>, vector<128x128xf32>, vector<8x128xf32> -> vector<8x128xf32>
    %64 = arith.addf %62, %63 : vector<8x128xf32>
    %65 = math.tanh %64 : vector<8x128xf32>
    %c7_49 = arith.constant 7 : index
    %c0_50 = arith.constant 0 : index
    %c0_51 = arith.constant 0 : index
    %66 = vector.load %arg4[%c7_49, %c0_50, %c0_51] : memref<8x8x128xf32, #tpu.memory_space<vmem>>, vector<1x8x128xf32>
    %67 = vector.shape_cast %66 : vector<1x8x128xf32> to vector<8x128xf32>
    %68 = vector.shape_cast %65 : vector<8x128xf32> to vector<1x8x128xf32>
    tpu.vector_store %arg4[%c7_49, %c0_50, %c0_51], %68 {strides = array<i32>} : memref<8x8x128xf32, #tpu.memory_space<vmem>>, vector<1x8x128xf32>,
    %c0_52 = arith.constant 0 : index
    %c0_53 = arith.constant 0 : index
    %69 = vector.load %arg6[%c0_52, %c0_53] : memref<8x128xf32, #tpu.memory_space<vmem>>, vector<8x128xf32>
    tpu.vector_store %arg6[%c0_52, %c0_53], %65 {strides = array<i32>} : memref<8x128xf32, #tpu.memory_space<vmem>>, vector<8x128xf32>,
    %c0_i32_54 = arith.constant 0 : i32
    %70 = arith.cmpi eq, %arg0, %c0_i32_54 : i32
    %71 = arith.extui %70 : i1 to i32
    %c0_i32_55 = arith.constant 0 : i32
    %72 = arith.cmpi ne, %71, %c0_i32_55 : i32
    scf.if %72 {
      %c0_56 = arith.constant 0 : index
      %c0_57 = arith.constant 0 : index
      %73 = vector.load %arg5[%c0_56, %c0_57] : memref<8x128xf32, #tpu.memory_space<vmem>>, vector<8x128xf32>
      tpu.vector_store %arg5[%c0_56, %c0_57], %65 {strides = array<i32>} : memref<8x128xf32, #tpu.memory_space<vmem>>, vector<8x128xf32>,
    } else {
    }
    return
  }
  func.func @transform_0(%arg0: i32) -> (i32, i32, i32) {
    %c0_i32 = arith.constant 0 : i32
    %c0_i32_0 = arith.constant 0 : i32
    %c0_i32_1 = arith.constant 0 : i32
    return %arg0, %c0_i32, %c0_i32_0 : i32, i32, i32
  }
  func.func @transform_1(%arg0: i32) -> (i32, i32) {
    %c0_i32 = arith.constant 0 : i32
    %c0_i32_0 = arith.constant 0 : i32
    %c0_i32_1 = arith.constant 0 : i32
    return %c0_i32, %c0_i32_0 : i32, i32
  }
  func.func @transform_2(%arg0: i32) -> (i32, i32) {
    %c0_i32 = arith.constant 0 : i32
    %c0_i32_0 = arith.constant 0 : i32
    %c0_i32_1 = arith.constant 0 : i32
    return %c0_i32, %c0_i32_0 : i32, i32
  }
  func.func @transform_3(%arg0: i32) -> (i32, i32, i32) {
    %c0_i32 = arith.constant 0 : i32
    %c0_i32_0 = arith.constant 0 : i32
    %c0_i32_1 = arith.constant 0 : i32
    return %arg0, %c0_i32, %c0_i32_0 : i32, i32, i32
  }
  func.func @transform_4(%arg0: i32) -> (i32, i32) {
    %c0_i32 = arith.constant 0 : i32
    %c0_i32_0 = arith.constant 0 : i32
    %c0_i32_1 = arith.constant 0 : i32
    return %c0_i32, %c0_i32_0 : i32, i32
  }
}

</mosaic_0001>

<llo_original>
// kernel: char_rnn_forward.3
$region0: #{char_rnn_forward.3}
  #allocation0 [shape = 'u32[]', space=smem, size = 0x4, offset = 0x4, fixed_abs, tag = 'smem constant byte address 0x4 - core index']
  #allocation1 [shape = 'u32[144,128]{1,0:T(1,128)}', space=vmem, size = 0x12000, scoped, tag = 'internal scratch']
  %s0 = inlined_call_operand.vmem [shape: f32[64,128], index: 0, kind: input, shape index: {}]
  %s1 = inlined_call_operand.vmem [shape: f32[128,128], index: 1, kind: input, shape index: {}]
  %s2 = inlined_call_operand.vmem [shape: f32[1,128], index: 2, kind: input, shape index: {}]
  %s3 = inlined_call_operand.vmem [shape: f32[64,128], index: 3, kind: output, shape index: {}]
  %s4 = sld [smem:[#allocation0]]
  $region22: #{char_rnn_forward.3} parent=0
    _
  %s6 = ssub.s32 1, %s4
  %s7 = scalar_select 0, %s6, %s4
  // Predicated region
  $region2: #{char_rnn_forward.3} parent=0 // pred_check
    _
  $region3: #{char_rnn_forward.3} parent=0 // pred_check_branch
    %9 = sbr.rel (0) target = $region5
  $region4: #{char_rnn_forward.3} parent=0 // pred_region
    _
  $region5: #{char_rnn_forward.3} parent=0 // pred_fallthru
    _
  // Predicated region
  $region6: #{char_rnn_forward.3} parent=0 // pred_check
    _
  $region7: #{char_rnn_forward.3} parent=0 // pred_check_branch
    %11 = sbr.rel (0) target = $region9
  $region8: #{char_rnn_forward.3} parent=0 // pred_region
    _
  $region9: #{char_rnn_forward.3} parent=0 // pred_fallthru
    _
  // Predicated region
  $region10: #{char_rnn_forward.3} parent=0 // pred_check
    _
  $region11: #{char_rnn_forward.3} parent=0 // pred_check_branch
    %13 = sbr.rel (0) target = $region13
  $region12: #{char_rnn_forward.3} parent=0 // pred_region
    _
  $region13: #{char_rnn_forward.3} parent=0 // pred_fallthru
    _
  %v14 = vld [vmem:[%s0] sm:$0xff]
  %v15 = vld [vmem:[%s0 + $0x8] sm:$0xff]
  %v16 = vld [vmem:[%s0 + $0x10] sm:$0xff]
  %v17 = vld [vmem:[%s0 + $0x18] sm:$0xff]
  %v18 = vld [vmem:[%s0 + $0x20] sm:$0xff]
  %v19 = vld [vmem:[%s0 + $0x28] sm:$0xff]
  %v20 = vld [vmem:[%s0 + $0x30] sm:$0xff]
  %v21 = vld [vmem:[%s0 + $0x38] sm:$0xff]
  %v22 = vld [vmem:[%s1] sm:$0xff]
  %v23 = vld [vmem:[%s1 + $0x8] sm:$0xff]
  %v24 = vld [vmem:[%s1 + $0x10] sm:$0xff]
  %v25 = vld [vmem:[%s1 + $0x18] sm:$0xff]
  %v26 = vld [vmem:[%s1 + $0x20] sm:$0xff]
  %v27 = vld [vmem:[%s1 + $0x28] sm:$0xff]
  %v28 = vld [vmem:[%s1 + $0x30] sm:$0xff]
  %v29 = vld [vmem:[%s1 + $0x38] sm:$0xff]
  %v30 = vld [vmem:[%s1 + $0x40] sm:$0xff]
  %v31 = vld [vmem:[%s1 + $0x48] sm:$0xff]
  %v32 = vld [vmem:[%s1 + $0x50] sm:$0xff]
  %v33 = vld [vmem:[%s1 + $0x58] sm:$0xff]
  %v34 = vld [vmem:[%s1 + $0x60] sm:$0xff]
  %v35 = vld [vmem:[%s1 + $0x68] sm:$0xff]
  %v36 = vld [vmem:[%s1 + $0x70] sm:$0xff]
  %v37 = vld [vmem:[%s1 + $0x78] sm:$0xff]
  %v38 = vld [vmem:[%s2] sm:$0x1]
  %v40 = vlaneseq
  %v41 = vshrl.u32 %v40, 7
  %v42 = vsub.s32 0, %v41
  %v43 = vrot.slane %v38, %v42
  %45 = vmatprep.subr.mxu0 0.0
  %46 = vmatpush1.msra.mxu0 %v37
  %47 = vmatprep.subr.mxu0 0.0
  %48 = vmatpush1.msra.mxu0 %v36
  %49 = vmatprep.subr.mxu0 0.0
  %50 = vmatpush1.msra.mxu0 %v35
  %51 = vmatprep.subr.mxu0 0.0
  %52 = vmatpush1.msra.mxu0 %v34
  %53 = vmatprep.subr.mxu0 0.0
  %54 = vmatpush1.msra.mxu0 %v33
  %55 = vmatprep.subr.mxu0 0.0
  %56 = vmatpush1.msra.mxu0 %v32
  %57 = vmatprep.subr.mxu0 0.0
  %58 = vmatpush1.msra.mxu0 %v31
  %59 = vmatprep.subr.mxu0 0.0
  %60 = vmatpush1.msra.mxu0 %v30
  %61 = vmatprep.subr.mxu0 0.0
  %62 = vmatpush1.msra.mxu0 %v29
  %63 = vmatprep.subr.mxu0 0.0
  %64 = vmatpush1.msra.mxu0 %v28
  %65 = vmatprep.subr.mxu0 0.0
  %66 = vmatpush1.msra.mxu0 %v27
  %67 = vmatprep.subr.mxu0 0.0
  %68 = vmatpush1.msra.mxu0 %v26
  %69 = vmatprep.subr.mxu0 0.0
  %70 = vmatpush1.msra.mxu0 %v25
  %71 = vmatprep.subr.mxu0 0.0
  %72 = vmatpush1.msra.mxu0 %v24
  %73 = vmatprep.subr.mxu0 0.0
  %74 = vmatpush1.msra.mxu0 %v23
  %75 = vmatprep.subr.mxu0 0.0
  %76 = vmatpush1.msra.mxu0 %v22
  %77 = vmatprep.subr.mxu0 0.0
  %78 = vmatpush2.msra.mxu0 0.0
  %79 = vmatprep.subr.mxu0 0.0
  %80 = vmatpush2.msra.mxu0 0.0
  %81 = vmatprep.subr.mxu0 0.0
  %82 = vmatpush2.msra.mxu0 0.0
  %83 = vmatprep.subr.mxu0 0.0
  %84 = vmatpush2.msra.mxu0 0.0
  %85 = vmatprep.subr.mxu0 0.0
  %86 = vmatpush2.msra.mxu0 0.0
  %87 = vmatprep.subr.mxu0 0.0
  %88 = vmatpush2.msra.mxu0 0.0
  %89 = vmatprep.subr.mxu0 0.0
  %90 = vmatpush2.msra.mxu0 0.0
  %91 = vmatprep.subr.mxu0 0.0
  %92 = vmatpush2.msra.mxu0 0.0
  %93 = vmatprep.subr.mxu0 0.0
  %94 = vmatpush2.msra.mxu0 0.0
  %95 = vmatprep.subr.mxu0 0.0
  %96 = vmatpush2.msra.mxu0 0.0
  %97 = vmatprep.subr.mxu0 0.0
  %98 = vmatpush2.msra.mxu0 0.0
  %99 = vmatprep.subr.mxu0 0.0
  %100 = vmatpush2.msra.mxu0 0.0
  %101 = vmatprep.subr.mxu0 0.0
  %102 = vmatpush2.msra.mxu0 0.0
  %103 = vmatprep.subr.mxu0 0.0
  %104 = vmatpush2.msra.mxu0 0.0
  %105 = vmatprep.subr.mxu0 0.0
  %106 = vmatpush2.msra.mxu0 0.0
  %107 = vmatprep.subr.mxu0 0.0
  %108 = vmatpush2.msra.mxu0 0.0
  %109 = vmatprep.mubr.f32.mxu0 0.0
  %110 = vmatmul.mubr.f32.gmra.mxu0 %v14
  %v111 = vpop.f32.mrf.mxu0
  %v112 = vadd.f32 %v43, %v111
  %v113 = vpop.f32.mrf.mxu0
  %114 = vmatprep.mubr.f32.mxu0 0.0
  %115 = vmatmul.mubr.f32.gmra.mxu0 %v15
  %v116 = vpop.f32.mrf.mxu0
  %v117 = vadd.f32 %v43, %v116
  %v118 = vpop.f32.mrf.mxu0
  %119 = vmatprep.mubr.f32.mxu0 0.0
  %120 = vmatmul.mubr.f32.gmra.mxu0 %v16
  %v121 = vpop.f32.mrf.mxu0
  %v122 = vadd.f32 %v43, %v121
  %v123 = vpop.f32.mrf.mxu0
  %124 = vmatprep.mubr.f32.mxu0 0.0
  %125 = vmatmul.mubr.f32.gmra.mxu0 %v17
  %v126 = vpop.f32.mrf.mxu0
  %v127 = vadd.f32 %v43, %v126
  %v128 = vpop.f32.mrf.mxu0
  %129 = vmatprep.mubr.f32.mxu0 0.0
  %130 = vmatmul.mubr.f32.gmra.mxu0 %v18
  %v131 = vpop.f32.mrf.mxu0
  %v132 = vadd.f32 %v43, %v131
  %v133 = vpop.f32.mrf.mxu0
  %134 = vmatprep.mubr.f32.mxu0 0.0
  %135 = vmatmul.mubr.f32.gmra.mxu0 %v19
  %v136 = vpop.f32.mrf.mxu0
  %v137 = vadd.f32 %v43, %v136
  %v138 = vpop.f32.mrf.mxu0
  %139 = vmatprep.mubr.f32.mxu0 0.0
  %140 = vmatmul.mubr.f32.gmra.mxu0 %v20
  %v141 = vpop.f32.mrf.mxu0
  %v142 = vadd.f32 %v43, %v141
  %v143 = vpop.f32.mrf.mxu0
  %144 = vmatprep.mubr.f32.mxu0 0.0
  %145 = vmatmul.mubr.f32.gmra.mxu0 %v21
  %v146 = vpop.f32.mrf.mxu0
  %v147 = vadd.f32 %v43, %v146
  %v148 = vpop.f32.mrf.mxu0
  %149 = vdwg.mxu0
  %150 = vst [vmem:[%s3] sm:$0xff] %v112
  %151 = vst [vmem:[%s3 + $0x8] sm:$0xff] %v117
  %152 = vst [vmem:[%s3 + $0x10] sm:$0xff] %v122
  %153 = vst [vmem:[%s3 + $0x18] sm:$0xff] %v127
  %154 = vst [vmem:[%s3 + $0x20] sm:$0xff] %v132
  %155 = vst [vmem:[%s3 + $0x28] sm:$0xff] %v137
  %156 = vst [vmem:[%s3 + $0x30] sm:$0xff] %v142
  %157 = vst [vmem:[%s3 + $0x38] sm:$0xff] %v147
  // Predicated region
  $region14: #{char_rnn_forward.3} parent=0 // pred_check
    _
  $region15: #{char_rnn_forward.3} parent=0 // pred_check_branch
    %159 = sbr.rel (0) target = $region17
  $region16: #{char_rnn_forward.3} parent=0 // pred_region
    _
  $region17: #{char_rnn_forward.3} parent=0 // pred_fallthru
    _
  // Predicated region
  $region18: #{char_rnn_forward.3} parent=0 // pred_check
    _
  $region19: #{char_rnn_forward.3} parent=0 // pred_check_branch
    %161 = sbr.rel (0) target = $region21
  $region20: #{char_rnn_forward.3} parent=0 // pred_region
    _
  $region21: #{char_rnn_forward.3} parent=0 // pred_fallthru
    _

// kernel: char_rnn_forward.4
$region0: #{char_rnn_forward.4}
  #allocation0 [shape = 'u32[]', space=smem, size = 0x4, offset = 0x4, fixed_abs, tag = 'smem constant byte address 0x4 - core index']
  #allocation1 [shape = 'u32[144,128]{1,0:T(1,128)}', space=vmem, size = 0x12000, scoped, tag = 'internal scratch']
  #allocation2 [shape = 'f32[8,128]{1,0:T(8,128)}', space=vmem, size = 0x1000, scoped, tag = 'scratch operand']
  %s0 = inlined_call_operand.vmem [shape: f32[8,8,128], index: 0, kind: input, shape index: {}]
  %s1 = inlined_call_operand.vmem [shape: f32[8,128], index: 1, kind: input, shape index: {}]
  %s2 = inlined_call_operand.vmem [shape: f32[128,128], index: 2, kind: input, shape index: {}]
  %s3 = inlined_call_operand.vmem [shape: f32[8,8,128], index: 3, kind: output, shape index: {0}]
  %s4 = inlined_call_operand.vmem [shape: f32[8,128], index: 4, kind: output, shape index: {1}]
  %5 = xla_tuple %s3, %s4
  %s6 = sld [smem:[#allocation0]]
  $region38: #{char_rnn_forward.4} parent=0
    _
  %s8 = ssub.s32 1, %s6
  %s9 = scalar_select 0, %s8, %s6
  // Predicated region
  $region2: #{char_rnn_forward.4} parent=0 // pred_check
    _
  $region3: #{char_rnn_forward.4} parent=0 // pred_check_branch
    %11 = sbr.rel (0) target = $region5
  $region4: #{char_rnn_forward.4} parent=0 // pred_region
    _
  $region5: #{char_rnn_forward.4} parent=0 // pred_fallthru
    _
  // Predicated region
  $region6: #{char_rnn_forward.4} parent=0 // pred_check
    _
  $region7: #{char_rnn_forward.4} parent=0 // pred_check_branch
    %13 = sbr.rel (0) target = $region9
  $region8: #{char_rnn_forward.4} parent=0 // pred_region
    _
  $region9: #{char_rnn_forward.4} parent=0 // pred_fallthru
    _
  // Predicated region
  $region10: #{char_rnn_forward.4} parent=0 // pred_check
    _
  $region11: #{char_rnn_forward.4} parent=0 // pred_check_branch
    %15 = sbr.rel (0) target = $region13
  $region12: #{char_rnn_forward.4} parent=0 // pred_region
    _
  $region13: #{char_rnn_forward.4} parent=0 // pred_fallthru
    _
  %p16 = scmp.eq.s32.totalorder 0, 0
  // Predicated region
  $region14: #{char_rnn_forward.4} parent=0 // pred_check
    %p17 = pneg %p16
  $region15: #{char_rnn_forward.4} parent=0 // pred_check_branch
    %19 = sbr.rel (%p17) target = $region17
  $region16: #{char_rnn_forward.4} parent=0 // pred_region
    %v20 = vld [vmem:[%s1] sm:$0xff]
    %21 = vst [vmem:[#allocation2] sm:$0xff] %v20
  $region17: #{char_rnn_forward.4} parent=0 // pred_fallthru
    _
  %v22 = vld [vmem:[#allocation2] sm:$0xff]
  %v23 = vld [vmem:[%s2] sm:$0xff]
  %v24 = vld [vmem:[%s2 + $0x8] sm:$0xff]
  %v25 = vld [vmem:[%s2 + $0x10] sm:$0xff]
  %v26 = vld [vmem:[%s2 + $0x18] sm:$0xff]
  %v27 = vld [vmem:[%s2 + $0x20] sm:$0xff]
  %v28 = vld [vmem:[%s2 + $0x28] sm:$0xff]
  %v29 = vld [vmem:[%s2 + $0x30] sm:$0xff]
  %v30 = vld [vmem:[%s2 + $0x38] sm:$0xff]
  %v31 = vld [vmem:[%s2 + $0x40] sm:$0xff]
  %v32 = vld [vmem:[%s2 + $0x48] sm:$0xff]
  %v33 = vld [vmem:[%s2 + $0x50] sm:$0xff]
  %v34 = vld [vmem:[%s2 + $0x58] sm:$0xff]
  %v35 = vld [vmem:[%s2 + $0x60] sm:$0xff]
  %v36 = vld [vmem:[%s2 + $0x68] sm:$0xff]
  %v37 = vld [vmem:[%s2 + $0x70] sm:$0xff]
  %v38 = vld [vmem:[%s2 + $0x78] sm:$0xff]
  %v39 = vld [vmem:[%s0] sm:$0xff]
  %40 = vmatprep.subr.mxu0 0.0
  %41 = vmatpush1.msra.mxu0 %v38
  %42 = vmatprep.subr.mxu0 0.0
  %43 = vmatpush1.msra.mxu0 %v37
  %44 = vmatprep.subr.mxu0 0.0
  %45 = vmatpush1.msra.mxu0 %v36
  %46 = vmatprep.subr.mxu0 0.0
  %47 = vmatpush1.msra.mxu0 %v35
  %48 = vmatprep.subr.mxu0 0.0
  %49 = vmatpush1.msra.mxu0 %v34
  %50 = vmatprep.subr.mxu0 0.0
  %51 = vmatpush1.msra.mxu0 %v33
  %52 = vmatprep.subr.mxu0 0.0
  %53 = vmatpush1.msra.mxu0 %v32
  %54 = vmatprep.subr.mxu0 0.0
  %55 = vmatpush1.msra.mxu0 %v31
  %56 = vmatprep.subr.mxu0 0.0
  %57 = vmatpush1.msra.mxu0 %v30
  %58 = vmatprep.subr.mxu0 0.0
  %59 = vmatpush1.msra.mxu0 %v29
  %60 = vmatprep.subr.mxu0 0.0
  %61 = vmatpush1.msra.mxu0 %v28
  %62 = vmatprep.subr.mxu0 0.0
  %63 = vmatpush1.msra.mxu0 %v27
  %64 = vmatprep.subr.mxu0 0.0
  %65 = vmatpush1.msra.mxu0 %v26
  %66 = vmatprep.subr.mxu0 0.0
  %67 = vmatpush1.msra.mxu0 %v25
  %68 = vmatprep.subr.mxu0 0.0
  %69 = vmatpush1.msra.mxu0 %v24
  %70 = vmatprep.subr.mxu0 0.0
  %71 = vmatpush1.msra.mxu0 %v23
  %72 = vmatprep.subr.mxu0 0.0
  %73 = vmatpush2.msra.mxu0 0.0
  %74 = vmatprep.subr.mxu0 0.0
  %75 = vmatpush2.msra.mxu0 0.0
  %76 = vmatprep.subr.mxu0 0.0
  %77 = vmatpush2.msra.mxu0 0.0
  %78 = vmatprep.subr.mxu0 0.0
  %79 = vmatpush2.msra.mxu0 0.0
  %80 = vmatprep.subr.mxu0 0.0
  %81 = vmatpush2.msra.mxu0 0.0
  %82 = vmatprep.subr.mxu0 0.0
  %83 = vmatpush2.msra.mxu0 0.0
  %84 = vmatprep.subr.mxu0 0.0
  %85 = vmatpush2.msra.mxu0 0.0
  %86 = vmatprep.subr.mxu0 0.0
  %87 = vmatpush2.msra.mxu0 0.0
  %88 = vmatprep.subr.mxu0 0.0
  %89 = vmatpush2.msra.mxu0 0.0
  %90 = vmatprep.subr.mxu0 0.0
  %91 = vmatpush2.msra.mxu0 0.0
  %92 = vmatprep.subr.mxu0 0.0
  %93 = vmatpush2.msra.mxu0 0.0
  %94 = vmatprep.subr.mxu0 0.0
  %95 = vmatpush2.msra.mxu0 0.0
  %96 = vmatprep.subr.mxu0 0.0
  %97 = vmatpush2.msra.mxu0 0.0
  %98 = vmatprep.subr.mxu0 0.0
  %99 = vmatpush2.msra.mxu0 0.0
  %100 = vmatprep.subr.mxu0 0.0
  %101 = vmatpush2.msra.mxu0 0.0
  %102 = vmatprep.subr.mxu0 0.0
  %103 = vmatpush2.msra.mxu0 0.0
  %104 = vmatprep.mubr.f32.mxu0 0.0
  %105 = vmatmul.mubr.f32.gmra.mxu0 %v22
  %v106 = vpop.f32.mrf.mxu0
  %v107 = vadd.f32 0.0, %v106
  %v108 = vpop.f32.mrf.mxu0
  %109 = vdwg.mxu0
  %v110 = vadd.f32 %v39, %v107
  %v111 = vtanh.pop %v110
  %112 = vst [vmem:[%s3] sm:$0xff] %v111
  %s113 = scalar_lea.vmem %s0, 8
  %v114 = vld [vmem:[%s113] sm:$0xff]
  %115 = vmatprep.subr.mxu0 0.0
  %116 = vmatpush1.msra.mxu0 %v38
  %117 = vmatprep.subr.mxu0 0.0
  %118 = vmatpush1.msra.mxu0 %v37
  %119 = vmatprep.subr.mxu0 0.0
  %120 = vmatpush1.msra.mxu0 %v36
  %121 = vmatprep.subr.mxu0 0.0
  %122 = vmatpush1.msra.mxu0 %v35
  %123 = vmatprep.subr.mxu0 0.0
  %124 = vmatpush1.msra.mxu0 %v34
  %125 = vmatprep.subr.mxu0 0.0
  %126 = vmatpush1.msra.mxu0 %v33
  %127 = vmatprep.subr.mxu0 0.0
  %128 = vmatpush1.msra.mxu0 %v32
  %129 = vmatprep.subr.mxu0 0.0
  %130 = vmatpush1.msra.mxu0 %v31
  %131 = vmatprep.subr.mxu0 0.0
  %132 = vmatpush1.msra.mxu0 %v30
  %133 = vmatprep.subr.mxu0 0.0
  %134 = vmatpush1.msra.mxu0 %v29
  %135 = vmatprep.subr.mxu0 0.0
  %136 = vmatpush1.msra.mxu0 %v28
  %137 = vmatprep.subr.mxu0 0.0
  %138 = vmatpush1.msra.mxu0 %v27
  %139 = vmatprep.subr.mxu0 0.0
  %140 = vmatpush1.msra.mxu0 %v26
  %141 = vmatprep.subr.mxu0 0.0
  %142 = vmatpush1.msra.mxu0 %v25
  %143 = vmatprep.subr.mxu0 0.0
  %144 = vmatpush1.msra.mxu0 %v24
  %145 = vmatprep.subr.mxu0 0.0
  %146 = vmatpush1.msra.mxu0 %v23
  %147 = vmatprep.subr.mxu0 0.0
  %148 = vmatpush2.msra.mxu0 0.0
  %149 = vmatprep.subr.mxu0 0.0
  %150 = vmatpush2.msra.mxu0 0.0
  %151 = vmatprep.subr.mxu0 0.0
  %152 = vmatpush2.msra.mxu0 0.0
  %153 = vmatprep.subr.mxu0 0.0
  %154 = vmatpush2.msra.mxu0 0.0
  %155 = vmatprep.subr.mxu0 0.0
  %156 = vmatpush2.msra.mxu0 0.0
  %157 = vmatprep.subr.mxu0 0.0
  %158 = vmatpush2.msra.mxu0 0.0
  %159 = vmatprep.subr.mxu0 0.0
  %160 = vmatpush2.msra.mxu0 0.0
  %161 = vmatprep.subr.mxu0 0.0
  %162 = vmatpush2.msra.mxu0 0.0
  %163 = vmatprep.subr.mxu0 0.0
  %164 = vmatpush2.msra.mxu0 0.0
  %165 = vmatprep.subr.mxu0 0.0
  %166 = vmatpush2.msra.mxu0 0.0
  %167 = vmatprep.subr.mxu0 0.0
  %168 = vmatpush2.msra.mxu0 0.0
  %169 = vmatprep.subr.mxu0 0.0
  %170 = vmatpush2.msra.mxu0 0.0
  %171 = vmatprep.subr.mxu0 0.0
  %172 = vmatpush2.msra.mxu0 0.0
  %173 = vmatprep.subr.mxu0 0.0
  %174 = vmatpush2.msra.mxu0 0.0
  %175 = vmatprep.subr.mxu0 0.0
  %176 = vmatpush2.msra.mxu0 0.0
  %177 = vmatprep.subr.mxu0 0.0
  %178 = vmatpush2.msra.mxu0 0.0
  %179 = vmatprep.mubr.f32.mxu0 0.0
  %180 = vmatmul.mubr.f32.gmra.mxu0 %v111
  %v181 = vpop.f32.mrf.mxu0
  %v182 = vadd.f32 0.0, %v181
  %v183 = vpop.f32.mrf.mxu0
  %184 = vdwg.mxu0
  %v185 = vadd.f32 %v114, %v182
  %v186 = vtanh.pop %v185
  %s187 = scalar_lea.vmem %s3, 8
  %188 = vst [vmem:[%s187] sm:$0xff] %v186
  %s189 = scalar_lea.vmem %s0, 16
  %v190 = vld [vmem:[%s189] sm:$0xff]
  %191 = vmatprep.subr.mxu0 0.0
  %192 = vmatpush1.msra.mxu0 %v38
  %193 = vmatprep.subr.mxu0 0.0
  %194 = vmatpush1.msra.mxu0 %v37
  %195 = vmatprep.subr.mxu0 0.0
  %196 = vmatpush1.msra.mxu0 %v36
  %197 = vmatprep.subr.mxu0 0.0
  %198 = vmatpush1.msra.mxu0 %v35
  %199 = vmatprep.subr.mxu0 0.0
  %200 = vmatpush1.msra.mxu0 %v34
  %201 = vmatprep.subr.mxu0 0.0
  %202 = vmatpush1.msra.mxu0 %v33
  %203 = vmatprep.subr.mxu0 0.0
  %204 = vmatpush1.msra.mxu0 %v32
  %205 = vmatprep.subr.mxu0 0.0
  %206 = vmatpush1.msra.mxu0 %v31
  %207 = vmatprep.subr.mxu0 0.0
  %208 = vmatpush1.msra.mxu0 %v30
  %209 = vmatprep.subr.mxu0 0.0
  %210 = vmatpush1.msra.mxu0 %v29
  %211 = vmatprep.subr.mxu0 0.0
  %212 = vmatpush1.msra.mxu0 %v28
  %213 = vmatprep.subr.mxu0 0.0
  %214 = vmatpush1.msra.mxu0 %v27
  %215 = vmatprep.subr.mxu0 0.0
  %216 = vmatpush1.msra.mxu0 %v26
  %217 = vmatprep.subr.mxu0 0.0
  %218 = vmatpush1.msra.mxu0 %v25
  %219 = vmatprep.subr.mxu0 0.0
  %220 = vmatpush1.msra.mxu0 %v24
  %221 = vmatprep.subr.mxu0 0.0
  %222 = vmatpush1.msra.mxu0 %v23
  %223 = vmatprep.subr.mxu0 0.0
  %224 = vmatpush2.msra.mxu0 0.0
  %225 = vmatprep.subr.mxu0 0.0
  %226 = vmatpush2.msra.mxu0 0.0
  %227 = vmatprep.subr.mxu0 0.0
  %228 = vmatpush2.msra.mxu0 0.0
  %229 = vmatprep.subr.mxu0 0.0
  %230 = vmatpush2.msra.mxu0 0.0
  %231 = vmatprep.subr.mxu0 0.0
  %232 = vmatpush2.msra.mxu0 0.0
  %233 = vmatprep.subr.mxu0 0.0
  %234 = vmatpush2.msra.mxu0 0.0
  %235 = vmatprep.subr.mxu0 0.0
  %236 = vmatpush2.msra.mxu0 0.0
  %237 = vmatprep.subr.mxu0 0.0
  %238 = vmatpush2.msra.mxu0 0.0
  %239 = vmatprep.subr.mxu0 0.0
  %240 = vmatpush2.msra.mxu0 0.0
  %241 = vmatprep.subr.mxu0 0.0
  %242 = vmatpush2.msra.mxu0 0.0
  %243 = vmatprep.subr.mxu0 0.0
  %244 = vmatpush2.msra.mxu0 0.0
  %245 = vmatprep.subr.mxu0 0.0
  %246 = vmatpush2.msra.mxu0 0.0
  %247 = vmatprep.subr.mxu0 0.0
  %248 = vmatpush2.msra.mxu0 0.0
  %249 = vmatprep.subr.mxu0 0.0
  %250 = vmatpush2.msra.mxu0 0.0
  %251 = vmatprep.subr.mxu0 0.0
  %252 = vmatpush2.msra.mxu0 0.0
  %253 = vmatprep.subr.mxu0 0.0
  %254 = vmatpush2.msra.mxu0 0.0
  %255 = vmatprep.mubr.f32.mxu0 0.0
  %256 = vmatmul.mubr.f32.gmra.mxu0 %v186
  %v257 = vpop.f32.mrf.mxu0
  %v258 = vadd.f32 0.0, %v257
  %v259 = vpop.f32.mrf.mxu0
  %260 = vdwg.mxu0
  %v261 = vadd.f32 %v190, %v258
  %v262 = vtanh.pop %v261
  %s263 = scalar_lea.vmem %s3, 16
  %264 = vst [vmem:[%s263] sm:$0xff] %v262
  %s265 = scalar_lea.vmem %s0, 24
  %v266 = vld [vmem:[%s265] sm:$0xff]
  %267 = vmatprep.subr.mxu0 0.0
  %268 = vmatpush1.msra.mxu0 %v38
  %269 = vmatprep.subr.mxu0 0.0
  %270 = vmatpush1.msra.mxu0 %v37
  %271 = vmatprep.subr.mxu0 0.0
  %272 = vmatpush1.msra.mxu0 %v36
  %273 = vmatprep.subr.mxu0 0.0
  %274 = vmatpush1.msra.mxu0 %v35
  %275 = vmatprep.subr.mxu0 0.0
  %276 = vmatpush1.msra.mxu0 %v34
  %277 = vmatprep.subr.mxu0 0.0
  %278 = vmatpush1.msra.mxu0 %v33
  %279 = vmatprep.subr.mxu0 0.0
  %280 = vmatpush1.msra.mxu0 %v32
  %281 = vmatprep.subr.mxu0 0.0
  %282 = vmatpush1.msra.mxu0 %v31
  %283 = vmatprep.subr.mxu0 0.0
  %284 = vmatpush1.msra.mxu0 %v30
  %285 = vmatprep.subr.mxu0 0.0
  %286 = vmatpush1.msra.mxu0 %v29
  %287 = vmatprep.subr.mxu0 0.0
  %288 = vmatpush1.msra.mxu0 %v28
  %289 = vmatprep.subr.mxu0 0.0
  %290 = vmatpush1.msra.mxu0 %v27
  %291 = vmatprep.subr.mxu0 0.0
  %292 = vmatpush1.msra.mxu0 %v26
  %293 = vmatprep.subr.mxu0 0.0
  %294 = vmatpush1.msra.mxu0 %v25
  %295 = vmatprep.subr.mxu0 0.0
  %296 = vmatpush1.msra.mxu0 %v24
  %297 = vmatprep.subr.mxu0 0.0
  %298 = vmatpush1.msra.mxu0 %v23
  %299 = vmatprep.subr.mxu0 0.0
  %300 = vmatpush2.msra.mxu0 0.0
  %301 = vmatprep.subr.mxu0 0.0
  %302 = vmatpush2.msra.mxu0 0.0
  %303 = vmatprep.subr.mxu0 0.0
  %304 = vmatpush2.msra.mxu0 0.0
  %305 = vmatprep.subr.mxu0 0.0
  %306 = vmatpush2.msra.mxu0 0.0
  %307 = vmatprep.subr.mxu0 0.0
  %308 = vmatpush2.msra.mxu0 0.0
  %309 = vmatprep.subr.mxu0 0.0
  %310 = vmatpush2.msra.mxu0 0.0
  %311 = vmatprep.subr.mxu0 0.0
  %312 = vmatpush2.msra.mxu0 0.0
  %313 = vmatprep.subr.mxu0 0.0
  %314 = vmatpush2.msra.mxu0 0.0
  %315 = vmatprep.subr.mxu0 0.0
  %316 = vmatpush2.msra.mxu0 0.0
  %317 = vmatprep.subr.mxu0 0.0
  %318 = vmatpush2.msra.mxu0 0.0
  %319 = vmatprep.subr.mxu0 0.0
  %320 = vmatpush2.msra.mxu0 0.0
  %321 = vmatprep.subr.mxu0 0.0
  %322 = vmatpush2.msra.mxu0 0.0
  %323 = vmatprep.subr.mxu0 0.0
  %324 = vmatpush2.msra.mxu0 0.0
  %325 = vmatprep.subr.mxu0 0.0
  %326 = vmatpush2.msra.mxu0 0.0
  %327 = vmatprep.subr.mxu0 0.0
  %328 = vmatpush2.msra.mxu0 0.0
  %329 = vmatprep.subr.mxu0 0.0
  %330 = vmatpush2.msra.mxu0 0.0
  %331 = vmatprep.mubr.f32.mxu0 0.0
  %332 = vmatmul.mubr.f32.gmra.mxu0 %v262
  %v333 = vpop.f32.mrf.mxu0
  %v334 = vadd.f32 0.0, %v333
  %v335 = vpop.f32.mrf.mxu0
  %336 = vdwg.mxu0
  %v337 = vadd.f32 %v266, %v334
  %v338 = vtanh.pop %v337
  %s339 = scalar_lea.vmem %s3, 24
  %340 = vst [vmem:[%s339] sm:$0xff] %v338
  %s341 = scalar_lea.vmem %s0, 32
  %v342 = vld [vmem:[%s341] sm:$0xff]
  %343 = vmatprep.subr.mxu0 0.0
  %344 = vmatpush1.msra.mxu0 %v38
  %345 = vmatprep.subr.mxu0 0.0
  %346 = vmatpush1.msra.mxu0 %v37
  %347 = vmatprep.subr.mxu0 0.0
  %348 = vmatpush1.msra.mxu0 %v36
  %349 = vmatprep.subr.mxu0 0.0
  %350 = vmatpush1.msra.mxu0 %v35
  %351 = vmatprep.subr.mxu0 0.0
  %352 = vmatpush1.msra.mxu0 %v34
  %353 = vmatprep.subr.mxu0 0.0
  %354 = vmatpush1.msra.mxu0 %v33
  %355 = vmatprep.subr.mxu0 0.0
  %356 = vmatpush1.msra.mxu0 %v32
  %357 = vmatprep.subr.mxu0 0.0
  %358 = vmatpush1.msra.mxu0 %v31
  %359 = vmatprep.subr.mxu0 0.0
  %360 = vmatpush1.msra.mxu0 %v30
  %361 = vmatprep.subr.mxu0 0.0
  %362 = vmatpush1.msra.mxu0 %v29
  %363 = vmatprep.subr.mxu0 0.0
  %364 = vmatpush1.msra.mxu0 %v28
  %365 = vmatprep.subr.mxu0 0.0
  %366 = vmatpush1.msra.mxu0 %v27
  %367 = vmatprep.subr.mxu0 0.0
  %368 = vmatpush1.msra.mxu0 %v26
  %369 = vmatprep.subr.mxu0 0.0
  %370 = vmatpush1.msra.mxu0 %v25
  %371 = vmatprep.subr.mxu0 0.0
  %372 = vmatpush1.msra.mxu0 %v24
  %373 = vmatprep.subr.mxu0 0.0
  %374 = vmatpush1.msra.mxu0 %v23
  %375 = vmatprep.subr.mxu0 0.0
  %376 = vmatpush2.msra.mxu0 0.0
  %377 = vmatprep.subr.mxu0 0.0
  %378 = vmatpush2.msra.mxu0 0.0
  %379 = vmatprep.subr.mxu0 0.0
  %380 = vmatpush2.msra.mxu0 0.0
  %381 = vmatprep.subr.mxu0 0.0
  %382 = vmatpush2.msra.mxu0 0.0
  %383 = vmatprep.subr.mxu0 0.0
  %384 = vmatpush2.msra.mxu0 0.0
  %385 = vmatprep.subr.mxu0 0.0
  %386 = vmatpush2.msra.mxu0 0.0
  %387 = vmatprep.subr.mxu0 0.0
  %388 = vmatpush2.msra.mxu0 0.0
  %389 = vmatprep.subr.mxu0 0.0
  %390 = vmatpush2.msra.mxu0 0.0
  %391 = vmatprep.subr.mxu0 0.0
  %392 = vmatpush2.msra.mxu0 0.0
  %393 = vmatprep.subr.mxu0 0.0
  %394 = vmatpush2.msra.mxu0 0.0
  %395 = vmatprep.subr.mxu0 0.0
  %396 = vmatpush2.msra.mxu0 0.0
  %397 = vmatprep.subr.mxu0 0.0
  %398 = vmatpush2.msra.mxu0 0.0
  %399 = vmatprep.subr.mxu0 0.0
  %400 = vmatpush2.msra.mxu0 0.0
  %401 = vmatprep.subr.mxu0 0.0
  %402 = vmatpush2.msra.mxu0 0.0
  %403 = vmatprep.subr.mxu0 0.0
  %404 = vmatpush2.msra.mxu0 0.0
  %405 = vmatprep.subr.mxu0 0.0
  %406 = vmatpush2.msra.mxu0 0.0
  %407 = vmatprep.mubr.f32.mxu0 0.0
  %408 = vmatmul.mubr.f32.gmra.mxu0 %v338
  %v409 = vpop.f32.mrf.mxu0
  %v410 = vadd.f32 0.0, %v409
  %v411 = vpop.f32.mrf.mxu0
  %412 = vdwg.mxu0
  %v413 = vadd.f32 %v342, %v410
  %v414 = vtanh.pop %v413
  %s415 = scalar_lea.vmem %s3, 32
  %416 = vst [vmem:[%s415] sm:$0xff] %v414
  %s417 = scalar_lea.vmem %s0, 40
  %v418 = vld [vmem:[%s417] sm:$0xff]
  %419 = vmatprep.subr.mxu0 0.0
  %420 = vmatpush1.msra.mxu0 %v38
  %421 = vmatprep.subr.mxu0 0.0
  %422 = vmatpush1.msra.mxu0 %v37
  %423 = vmatprep.subr.mxu0 0.0
  %424 = vmatpush1.msra.mxu0 %v36
  %425 = vmatprep.subr.mxu0 0.0
  %426 = vmatpush1.msra.mxu0 %v35
  %427 = vmatprep.subr.mxu0 0.0
  %428 = vmatpush1.msra.mxu0 %v34
  %429 = vmatprep.subr.mxu0 0.0
  %430 = vmatpush1.msra.mxu0 %v33
  %431 = vmatprep.subr.mxu0 0.0
  %432 = vmatpush1.msra.mxu0 %v32
  %433 = vmatprep.subr.mxu0 0.0
  %434 = vmatpush1.msra.mxu0 %v31
  %435 = vmatprep.subr.mxu0 0.0
  %436 = vmatpush1.msra.mxu0 %v30
  %437 = vmatprep.subr.mxu0 0.0
  %438 = vmatpush1.msra.mxu0 %v29
  %439 = vmatprep.subr.mxu0 0.0
  %440 = vmatpush1.msra.mxu0 %v28
  %441 = vmatprep.subr.mxu0 0.0
  %442 = vmatpush1.msra.mxu0 %v27
  %443 = vmatprep.subr.mxu0 0.0
  %444 = vmatpush1.msra.mxu0 %v26
  %445 = vmatprep.subr.mxu0 0.0
  %446 = vmatpush1.msra.mxu0 %v25
  %447 = vmatprep.subr.mxu0 0.0
  %448 = vmatpush1.msra.mxu0 %v24
  %449 = vmatprep.subr.mxu0 0.0
  %450 = vmatpush1.msra.mxu0 %v23
  %451 = vmatprep.subr.mxu0 0.0
  %452 = vmatpush2.msra.mxu0 0.0
  %453 = vmatprep.subr.mxu0 0.0
  %454 = vmatpush2.msra.mxu0 0.0
  %455 = vmatprep.subr.mxu0 0.0
  %456 = vmatpush2.msra.mxu0 0.0
  %457 = vmatprep.subr.mxu0 0.0
  %458 = vmatpush2.msra.mxu0 0.0
  %459 = vmatprep.subr.mxu0 0.0
  %460 = vmatpush2.msra.mxu0 0.0
  %461 = vmatprep.subr.mxu0 0.0
  %462 = vmatpush2.msra.mxu0 0.0
  %463 = vmatprep.subr.mxu0 0.0
  %464 = vmatpush2.msra.mxu0 0.0
  %465 = vmatprep.subr.mxu0 0.0
  %466 = vmatpush2.msra.mxu0 0.0
  %467 = vmatprep.subr.mxu0 0.0
  %468 = vmatpush2.msra.mxu0 0.0
  %469 = vmatprep.subr.mxu0 0.0
  %470 = vmatpush2.msra.mxu0 0.0
  %471 = vmatprep.subr.mxu0 0.0
  %472 = vmatpush2.msra.mxu0 0.0
  %473 = vmatprep.subr.mxu0 0.0
  %474 = vmatpush2.msra.mxu0 0.0
  %475 = vmatprep.subr.mxu0 0.0
  %476 = vmatpush2.msra.mxu0 0.0
  %477 = vmatprep.subr.mxu0 0.0
  %478 = vmatpush2.msra.mxu0 0.0
  %479 = vmatprep.subr.mxu0 0.0
  %480 = vmatpush2.msra.mxu0 0.0
  %481 = vmatprep.subr.mxu0 0.0
  %482 = vmatpush2.msra.mxu0 0.0
  %483 = vmatprep.mubr.f32.mxu0 0.0
  %484 = vmatmul.mubr.f32.gmra.mxu0 %v414
  %v485 = vpop.f32.mrf.mxu0
  %v486 = vadd.f32 0.0, %v485
  %v487 = vpop.f32.mrf.mxu0
  %488 = vdwg.mxu0
  %v489 = vadd.f32 %v418, %v486
  %v490 = vtanh.pop %v489
  %s491 = scalar_lea.vmem %s3, 40
  %492 = vst [vmem:[%s491] sm:$0xff] %v490
  %s493 = scalar_lea.vmem %s0, 48
  %v494 = vld [vmem:[%s493] sm:$0xff]
  %495 = vmatprep.subr.mxu0 0.0
  %496 = vmatpush1.msra.mxu0 %v38
  %497 = vmatprep.subr.mxu0 0.0
  %498 = vmatpush1.msra.mxu0 %v37
  %499 = vmatprep.subr.mxu0 0.0
  %500 = vmatpush1.msra.mxu0 %v36
  %501 = vmatprep.subr.mxu0 0.0
  %502 = vmatpush1.msra.mxu0 %v35
  %503 = vmatprep.subr.mxu0 0.0
  %504 = vmatpush1.msra.mxu0 %v34
  %505 = vmatprep.subr.mxu0 0.0
  %506 = vmatpush1.msra.mxu0 %v33
  %507 = vmatprep.subr.mxu0 0.0
  %508 = vmatpush1.msra.mxu0 %v32
  %509 = vmatprep.subr.mxu0 0.0
  %510 = vmatpush1.msra.mxu0 %v31
  %511 = vmatprep.subr.mxu0 0.0
  %512 = vmatpush1.msra.mxu0 %v30
  %513 = vmatprep.subr.mxu0 0.0
  %514 = vmatpush1.msra.mxu0 %v29
  %515 = vmatprep.subr.mxu0 0.0
  %516 = vmatpush1.msra.mxu0 %v28
  %517 = vmatprep.subr.mxu0 0.0
  %518 = vmatpush1.msra.mxu0 %v27
  %519 = vmatprep.subr.mxu0 0.0
  %520 = vmatpush1.msra.mxu0 %v26
  %521 = vmatprep.subr.mxu0 0.0
  %522 = vmatpush1.msra.mxu0 %v25
  %523 = vmatprep.subr.mxu0 0.0
  %524 = vmatpush1.msra.mxu0 %v24
  %525 = vmatprep.subr.mxu0 0.0
  %526 = vmatpush1.msra.mxu0 %v23
  %527 = vmatprep.subr.mxu0 0.0
  %528 = vmatpush2.msra.mxu0 0.0
  %529 = vmatprep.subr.mxu0 0.0
  %530 = vmatpush2.msra.mxu0 0.0
  %531 = vmatprep.subr.mxu0 0.0
  %532 = vmatpush2.msra.mxu0 0.0
  %533 = vmatprep.subr.mxu0 0.0
  %534 = vmatpush2.msra.mxu0 0.0
  %535 = vmatprep.subr.mxu0 0.0
  %536 = vmatpush2.msra.mxu0 0.0
  %537 = vmatprep.subr.mxu0 0.0
  %538 = vmatpush2.msra.mxu0 0.0
  %539 = vmatprep.subr.mxu0 0.0
  %540 = vmatpush2.msra.mxu0 0.0
  %541 = vmatprep.subr.mxu0 0.0
  %542 = vmatpush2.msra.mxu0 0.0
  %543 = vmatprep.subr.mxu0 0.0
  %544 = vmatpush2.msra.mxu0 0.0
  %545 = vmatprep.subr.mxu0 0.0
  %546 = vmatpush2.msra.mxu0 0.0
  %547 = vmatprep.subr.mxu0 0.0
  %548 = vmatpush2.msra.mxu0 0.0
  %549 = vmatprep.subr.mxu0 0.0
  %550 = vmatpush2.msra.mxu0 0.0
  %551 = vmatprep.subr.mxu0 0.0
  %552 = vmatpush2.msra.mxu0 0.0
  %553 = vmatprep.subr.mxu0 0.0
  %554 = vmatpush2.msra.mxu0 0.0
  %555 = vmatprep.subr.mxu0 0.0
  %556 = vmatpush2.msra.mxu0 0.0
  %557 = vmatprep.subr.mxu0 0.0
  %558 = vmatpush2.msra.mxu0 0.0
  %559 = vmatprep.mubr.f32.mxu0 0.0
  %560 = vmatmul.mubr.f32.gmra.mxu0 %v490
  %v561 = vpop.f32.mrf.mxu0
  %v562 = vadd.f32 0.0, %v561
  %v563 = vpop.f32.mrf.mxu0
  %564 = vdwg.mxu0
  %v565 = vadd.f32 %v494, %v562
  %v566 = vtanh.pop %v565
  %s567 = scalar_lea.vmem %s3, 48
  %568 = vst [vmem:[%s567] sm:$0xff] %v566
  %s569 = scalar_lea.vmem %s0, 56
  %v570 = vld [vmem:[%s569] sm:$0xff]
  %571 = vmatprep.subr.mxu0 0.0
  %572 = vmatpush1.msra.mxu0 %v38
  %573 = vmatprep.subr.mxu0 0.0
  %574 = vmatpush1.msra.mxu0 %v37
  %575 = vmatprep.subr.mxu0 0.0
  %576 = vmatpush1.msra.mxu0 %v36
  %577 = vmatprep.subr.mxu0 0.0
  %578 = vmatpush1.msra.mxu0 %v35
  %579 = vmatprep.subr.mxu0 0.0
  %580 = vmatpush1.msra.mxu0 %v34
  %581 = vmatprep.subr.mxu0 0.0
  %582 = vmatpush1.msra.mxu0 %v33
  %583 = vmatprep.subr.mxu0 0.0
  %584 = vmatpush1.msra.mxu0 %v32
  %585 = vmatprep.subr.mxu0 0.0
  %586 = vmatpush1.msra.mxu0 %v31
  %587 = vmatprep.subr.mxu0 0.0
  %588 = vmatpush1.msra.mxu0 %v30
  %589 = vmatprep.subr.mxu0 0.0
  %590 = vmatpush1.msra.mxu0 %v29
  %591 = vmatprep.subr.mxu0 0.0
  %592 = vmatpush1.msra.mxu0 %v28
  %593 = vmatprep.subr.mxu0 0.0
  %594 = vmatpush1.msra.mxu0 %v27
  %595 = vmatprep.subr.mxu0 0.0
  %596 = vmatpush1.msra.mxu0 %v26
  %597 = vmatprep.subr.mxu0 0.0
  %598 = vmatpush1.msra.mxu0 %v25
  %599 = vmatprep.subr.mxu0 0.0
  %600 = vmatpush1.msra.mxu0 %v24
  %601 = vmatprep.subr.mxu0 0.0
  %602 = vmatpush1.msra.mxu0 %v23
  %603 = vmatprep.subr.mxu0 0.0
  %604 = vmatpush2.msra.mxu0 0.0
  %605 = vmatprep.subr.mxu0 0.0
  %606 = vmatpush2.msra.mxu0 0.0
  %607 = vmatprep.subr.mxu0 0.0
  %608 = vmatpush2.msra.mxu0 0.0
  %609 = vmatprep.subr.mxu0 0.0
  %610 = vmatpush2.msra.mxu0 0.0
  %611 = vmatprep.subr.mxu0 0.0
  %612 = vmatpush2.msra.mxu0 0.0
  %613 = vmatprep.subr.mxu0 0.0
  %614 = vmatpush2.msra.mxu0 0.0
  %615 = vmatprep.subr.mxu0 0.0
  %616 = vmatpush2.msra.mxu0 0.0
  %617 = vmatprep.subr.mxu0 0.0
  %618 = vmatpush2.msra.mxu0 0.0
  %619 = vmatprep.subr.mxu0 0.0
  %620 = vmatpush2.msra.mxu0 0.0
  %621 = vmatprep.subr.mxu0 0.0
  %622 = vmatpush2.msra.mxu0 0.0
  %623 = vmatprep.subr.mxu0 0.0
  %624 = vmatpush2.msra.mxu0 0.0
  %625 = vmatprep.subr.mxu0 0.0
  %626 = vmatpush2.msra.mxu0 0.0
  %627 = vmatprep.subr.mxu0 0.0
  %628 = vmatpush2.msra.mxu0 0.0
  %629 = vmatprep.subr.mxu0 0.0
  %630 = vmatpush2.msra.mxu0 0.0
  %631 = vmatprep.subr.mxu0 0.0
  %632 = vmatpush2.msra.mxu0 0.0
  %633 = vmatprep.subr.mxu0 0.0
  %634 = vmatpush2.msra.mxu0 0.0
  %635 = vmatprep.mubr.f32.mxu0 0.0
  %636 = vmatmul.mubr.f32.gmra.mxu0 %v566
  %v637 = vpop.f32.mrf.mxu0
  %v638 = vadd.f32 0.0, %v637
  %v639 = vpop.f32.mrf.mxu0
  %640 = vdwg.mxu0
  %v641 = vadd.f32 %v570, %v638
  %v642 = vtanh.pop %v641
  %s643 = scalar_lea.vmem %s3, 56
  %644 = vst [vmem:[%s643] sm:$0xff] %v642
  %645 = vst [vmem:[#allocation2] sm:$0xff] %v642
  // Predicated region
  $region18: #{char_rnn_forward.4} parent=0 // pred_check
    %p646 = pneg %p16
  $region19: #{char_rnn_forward.4} parent=0 // pred_check_branch
    %648 = sbr.rel (%p646) target = $region21
  $region20: #{char_rnn_forward.4} parent=0 // pred_region
    %649 = vst [vmem:[%s4] sm:$0xff] %v642
  $region21: #{char_rnn_forward.4} parent=0 // pred_fallthru
    _
  // Predicated region
  $region22: #{char_rnn_forward.4} parent=0 // pred_check
    _
  $region23: #{char_rnn_forward.4} parent=0 // pred_check_branch
    %651 = sbr.rel (0) target = $region25
  $region24: #{char_rnn_forward.4} parent=0 // pred_region
    _
  $region25: #{char_rnn_forward.4} parent=0 // pred_fallthru
    _
  // Predicated region
  $region26: #{char_rnn_forward.4} parent=0 // pred_check
    _
  $region27: #{char_rnn_forward.4} parent=0 // pred_check_branch
    %653 = sbr.rel (0) target = $region29
  $region28: #{char_rnn_forward.4} parent=0 // pred_region
    _
  $region29: #{char_rnn_forward.4} parent=0 // pred_fallthru
    _
  // Predicated region
  $region30: #{char_rnn_forward.4} parent=0 // pred_check
    _
  $region31: #{char_rnn_forward.4} parent=0 // pred_check_branch
    %655 = sbr.rel (0) target = $region33
  $region32: #{char_rnn_forward.4} parent=0 // pred_region
    _
  $region33: #{char_rnn_forward.4} parent=0 // pred_fallthru
    _
  // Predicated region
  $region34: #{char_rnn_forward.4} parent=0 // pred_check
    _
  $region35: #{char_rnn_forward.4} parent=0 // pred_check_branch
    %657 = sbr.rel (0) target = $region37
  $region36: #{char_rnn_forward.4} parent=0 // pred_region
    _
  $region37: #{char_rnn_forward.4} parent=0 // pred_fallthru
    _

</llo_original>
